<compile_context>
chip_gen: v5e
topology: v5e:2x2
jax: 0.10.0
libtpu: 0.0.40
codegen_flags: <defaults>
</compile_context>

<pallas_src>
from functools import partial

import jax
import jax.numpy as jnp
from jax.experimental import pallas as pl
from jax.experimental.pallas import tpu as pltpu


def _cdiv(a, b):
    return (a + b - 1) // b


def _round_up(a, b):
    return _cdiv(a, b) * b


# ---------------- Pallas kernel ----------------

def _gcn_kernel(g_ref, h_ref, wt_ref, b_ref, out_ref, acc_ref, *, tk, h_resident):
    """One (tm x tk) step of z = g @ h, with fused Linear + bias + ReLU epilogue."""
    k = pl.program_id(1)

    @pl.when(k == 0)
    def _():
        acc_ref[...] = jnp.zeros_like(acc_ref)

    if h_resident:
        # h is fully VMEM-resident (constant index_map); slice the k-th chunk.
        start = pl.multiple_of(k * tk, tk)
        h_blk = h_ref[pl.ds(start, tk), :]
    else:
        h_blk = h_ref[...]

    # Aggregation: bf16 operands, exact f32 accumulation on the MXU.
    acc_ref[...] += jnp.dot(g_ref[...], h_blk, preferred_element_type=jnp.float32)

    @pl.when(k == pl.num_programs(1) - 1)
    def _():
        # Projection (nn.Linear): z = acc @ W^T + b, then activation (ReLU).
        z = jnp.dot(acc_ref[...], wt_ref[...],
                    preferred_element_type=jnp.float32) + b_ref[...]
        out_ref[...] = jnp.maximum(z, 0.0).astype(out_ref.dtype)


# ---------------- pallas_call wrapper ----------------

@partial(jax.jit, static_argnames=("tm", "tk", "h_resident_bytes"))
def gcn_forward(g, h, w, b, *, tm=512, tk=1024, h_resident_bytes=16 * 2**20):
    """Equivalent of GCN.forward(g, h) with act=ReLU and dropout p=0 (Identity).

    g : (N, N)         dense (normalized) adjacency
    h : (N, D_in)      node features
    w : (D_out, D_in)  nn.Linear weight
    b : (D_out,)       nn.Linear bias
    """
    N, D_in = h.shape
    D_out = w.shape[0]
    out_dtype = h.dtype
    out_isz = h.dtype.itemsize

    # ---- static tile selection (shapes are trace-time constants) -------------
    # Row tiles: keep padding waste modest and (for v7x megacore) >= 2 row tiles.
    tm = int(min(tm, _round_up(N, 128)))
    while tm > 128 and (_round_up(N, tm) - N > max(N // 8, 128) or _cdiv(N, tm) < 2):
        tm //= 2
    # Reduction tiles: big, but avoid > ~12.5% zero-padding waste on g columns.
    tk = int(min(tk, _round_up(N, 128)))
    while tk > 256 and _round_up(N, tk) - N > max(N // 8, 128):
        tk //= 2

    np_r = _round_up(N, tm)          # padded row extent
    np_c = _round_up(N, tk)          # padded reduction extent

    # ---- operand prep: bf16 streaming + zero padding --------------------------
    g_bf = g.astype(jnp.bfloat16)
    h_bf = h.astype(jnp.bfloat16)
    if np_r != N or np_c != N:
        g_bf = jnp.pad(g_bf, ((0, np_r - N), (0, np_c - N)))
    if np_c != N:
        h_bf = jnp.pad(h_bf, ((0, np_c - N), (0, 0)))
    wt = w.astype(jnp.float32).T                 # (D_in, D_out), lane-dense epilogue
    b2 = b.astype(jnp.float32).reshape(1, D_out)

    # Keep h fully resident in VMEM when small enough (kills the N/tm re-read).
    h_resident = (np_c * D_in * 2) <= h_resident_bytes
    if h_resident:
        h_spec = pl.BlockSpec((np_c, D_in), lambda i, k: (0, 0))
    else:
        h_spec = pl.BlockSpec((tk, D_in), lambda i, k: (k, 0))

    grid = (np_r // tm, np_c // tk)   # (row tiles [parallel], reduction tiles [arbitrary])

    # ---- VMEM budget & compiler params ----------------------------------------
    ws = (2 * tm * tk * 2                                        # g double-buffer (bf16)
          + (np_c * D_in * 2 if h_resident else 2 * tk * D_in * 2)  # h
          + 2 * D_in * D_out * 4 + 2 * D_out * 4                 # W^T + bias
          + 2 * tm * D_out * out_isz                             # out double-buffer
          + tm * D_in * 4)                                       # f32 accumulator
    vmem_limit = int(min(64 * 2**20, max(32 * 2**20, int(1.5 * ws))))

    cost = pl.CostEstimate(
        flops=2 * N * N * D_in + 2 * N * D_in * D_out,
        transcendentals=0,
        bytes_accessed=(np_r * np_c * 2 + np_c * D_in * 2
                        + D_in * D_out * 4 + D_out * 4 + np_r * D_out * out_isz),
    )

    out = pl.pallas_call(
        partial(_gcn_kernel, tk=tk, h_resident=h_resident),
        out_shape=jax.ShapeDtypeStruct((np_r, D_out), out_dtype),
        grid_spec=pltpu.PrefetchScalarGridSpec(
            num_scalar_prefetch=0,
            grid=grid,
            in_specs=[
                pl.BlockSpec((tm, tk), lambda i, k: (i, k)),        # g tile (bf16)
                h_spec,                                             # h (resident or streamed)
                pl.BlockSpec((D_in, D_out), lambda i, k: (0, 0)),   # W^T (resident)
                pl.BlockSpec((1, D_out), lambda i, k: (0, 0)),      # bias (resident)
            ],
            out_specs=pl.BlockSpec((tm, D_out), lambda i, k: (i, 0)),
            scratch_shapes=[pltpu.VMEM((tm, D_in), jnp.float32)],   # f32 accumulator
        ),
        compiler_params=pltpu.CompilerParams(
            dimension_semantics=("parallel", "arbitrary"),
            vmem_limit_bytes=vmem_limit),
        cost_estimate=cost,
    )(g_bf, h_bf, wt, b2)

    return out[:N]                                                  # drop padded rows


# TODO(synk): nn.Dropout with p > 0 (training-mode RNG masking) is not implemented;
#             the module uses Identity when p == 0, which is what we model.
# TODO(synk): `act` is a constructor argument in the PyTorch module; ReLU (the value
#             used by the Graph U-Net code) is hard-coded in the fused epilogue.
# TODO(synk): for D_in >> 128 configs, re-associating to g @ (h @ W^T) would fill
#             the 256-wide v6e/v7x MXU better; at D_in=D_out=128 the kernel is
#             HBM-bound and the current form is kept.


# ---------------- demo / self-check ----------------

if __name__ == "__main__":

    def run_case(key, N, D_in, D_out):
        kk = jax.random.split(key, 4)

        # Row-normalized adjacency with self loops (typical GCN input).
        adj = (jax.random.uniform(kk[0], (N, N)) < 0.1).astype(jnp.float32)
        adj = jnp.maximum(adj, jnp.eye(N, dtype=jnp.float32))
        g = adj / jnp.sum(adj, axis=1, keepdims=True)

        h = jax.random.normal(kk[1], (N, D_in), dtype=jnp.float32)
        w = jax.random.normal(kk[2], (D_out, D_in), dtype=jnp.float32) / jnp.sqrt(D_in)
        b = jax.random.normal(kk[3], (D_out,), dtype=jnp.float32) * 0.1

        out = gcn_forward(g, h, w, b)
        jax.block_until_ready(out)

        # Reference consistent with the kernel's bf16-streamed / f32-accumulated math.
        gq = g.astype(jnp.bfloat16).astype(jnp.float32)
        hq = h.astype(jnp.bfloat16).astype(jnp.float32)
        agg = jnp.dot(gq, hq, precision=jax.lax.Precision.HIGHEST)
        ref = jnp.maximum(
            jnp.dot(agg, w.T, precision=jax.lax.Precision.HIGHEST) + b[None, :], 0.0)

        assert out.shape == (N, D_out), (out.shape, (N, D_out))
        err = float(jnp.max(jnp.abs(out - ref)))
        assert err < 5e-3, err

    run_case(jax.random.PRNGKey(0), N=256, D_in=128, D_out=128)  # aligned shapes
    run_case(jax.random.PRNGKey(1), N=200, D_in=64, D_out=128)   # exercises padding path

    print("KERNEL_OK")
</pallas_src>

<mosaic_0001>
module attributes {stable_mosaic.version = 11 : i64} {
  func.func @_gcn_kernel(%arg0: i32, %arg1: i32, %arg2: memref<128x256xbf16, #tpu.memory_space<vmem>>, %arg3: memref<256x128xbf16, #tpu.memory_space<vmem>>, %arg4: memref<128x128xf32, #tpu.memory_space<vmem>>, %arg5: memref<1x128xf32, #tpu.memory_space<vmem>>, %arg6: memref<128x128xf32, #tpu.memory_space<vmem>>, %arg7: memref<128x128xf32, #tpu.memory_space<vmem>>) attributes {dimension_semantics = [#tpu.dimension_semantics<parallel>, #tpu.dimension_semantics<arbitrary>], iteration_bounds = array<i64: 2, 1>, scalar_prefetch = 0 : i64, scratch_operands = 1 : i64, tpu.core_type = #tpu.core_type<tc>, window_params = [{transform_indices = @transform_0, window_bounds = array<i64: 128, 256>}, {pipeline_mode = #tpu.pipeline_mode<synchronous>, transform_indices = @transform_1, window_bounds = array<i64: 256, 128>}, {pipeline_mode = #tpu.pipeline_mode<synchronous>, transform_indices = @transform_2, window_bounds = array<i64: 128, 128>}, {pipeline_mode = #tpu.pipeline_mode<synchronous>, transform_indices = @transform_3, window_bounds = array<i64: 1, 128>}, {transform_indices = @transform_4, window_bounds = array<i64: 128, 128>}]} {
    %c0_i32 = arith.constant 0 : i32
    %0 = arith.cmpi eq, %arg1, %c0_i32 : i32
    %1 = arith.extui %0 : i1 to i32
    %c0_i32_0 = arith.constant 0 : i32
    %2 = arith.cmpi ne, %1, %c0_i32_0 : i32
    scf.if %2 {
      %cst_9 = arith.constant 0.000000e+00 : f32
      %15 = vector.broadcast %cst_9 : f32 to vector<128x128xf32>
      %c0_10 = arith.constant 0 : index
      %c0_11 = arith.constant 0 : index
      %16 = vector.load %arg7[%c0_10, %c0_11] : memref<128x128xf32, #tpu.memory_space<vmem>>, vector<128x128xf32>
      tpu.vector_store %arg7[%c0_10, %c0_11], %15 {strides = array<i32>} : memref<128x128xf32, #tpu.memory_space<vmem>>, vector<128x128xf32>,
    } else {
    }
    %c256_i32 = arith.constant 256 : i32
    %3 = arith.muli %arg1, %c256_i32 : i32
    %4 = tpu.assume_multiple %3, 256 : i32
    %5 = arith.index_cast %4 : i32 to index
    %c0 = arith.constant 0 : index
    %6 = vector.load %arg3[%5, %c0] : memref<256x128xbf16, #tpu.memory_space<vmem>>, vector<256x128xbf16>
    %c0_1 = arith.constant 0 : index
    %c0_2 = arith.constant 0 : index
    %7 = vector.load %arg7[%c0_1, %c0_2] : memref<128x128xf32, #tpu.memory_space<vmem>>, vector<128x128xf32>
    %c0_3 = arith.constant 0 : index
    %c0_4 = arith.constant 0 : index
    %8 = vector.load %arg2[%c0_3, %c0_4] : memref<128x256xbf16, #tpu.memory_space<vmem>>, vector<128x256xbf16>
    %cst = arith.constant dense<0.000000e+00> : vector<128x128xf32>
    %9 = tpu.matmul %8, %6, %cst {dimension_numbers = #tpu.dot_dimension_numbers<[1], [0], [0], [1], [0, 0, 1, 1], [], []>} : vector<128x256xbf16>, vector<256x128xbf16>, vector<128x128xf32> -> vector<128x128xf32>
    %10 = arith.addf %7, %9 : vector<128x128xf32>
    %c0_5 = arith.constant 0 : index
    %c0_6 = arith.constant 0 : index
    %11 = vector.load %arg7[%c0_5, %c0_6] : memref<128x128xf32, #tpu.memory_space<vmem>>, vector<128x128xf32>
    tpu.vector_store %arg7[%c0_5, %c0_6], %10 {strides = array<i32>} : memref<128x128xf32, #tpu.memory_space<vmem>>, vector<128x128xf32>,
    %c0_i32_7 = arith.constant 0 : i32
    %12 = arith.cmpi eq, %arg1, %c0_i32_7 : i32
    %13 = arith.extui %12 : i1 to i32
    %c0_i32_8 = arith.constant 0 : i32
    %14 = arith.cmpi ne, %13, %c0_i32_8 : i32
    scf.if %14 {
      %c0_9 = arith.constant 0 : index
      %c0_10 = arith.constant 0 : index
      %15 = vector.load %arg7[%c0_9, %c0_10] : memref<128x128xf32, #tpu.memory_space<vmem>>, vector<128x128xf32>
      %c0_11 = arith.constant 0 : index
      %c0_12 = arith.constant 0 : index
      %16 = vector.load %arg4[%c0_11, %c0_12] : memref<128x128xf32, #tpu.memory_space<vmem>>, vector<128x128xf32>
      %cst_13 = arith.constant dense<0.000000e+00> : vector<128x128xf32>
      %17 = tpu.matmul %15, %16, %cst_13 {dimension_numbers = #tpu.dot_dimension_numbers<[1], [0], [0], [1], [0, 0, 1, 1], [], []>} : vector<128x128xf32>, vector<128x128xf32>, vector<128x128xf32> -> vector<128x128xf32>
      %c0_14 = arith.constant 0 : index
      %c0_15 = arith.constant 0 : index
      %18 = vector.load %arg5[%c0_14, %c0_15] : memref<1x128xf32, #tpu.memory_space<vmem>>, vector<1x128xf32>
      %19 = vector.broadcast %18 : vector<1x128xf32> to vector<128x128xf32>
      %20 = arith.addf %17, %19 : vector<128x128xf32>
      %cst_16 = arith.constant 0.000000e+00 : f32
      %21 = vector.broadcast %cst_16 : f32 to vector<128x128xf32>
      %22 = arith.maximumf %20, %21 : vector<128x128xf32>
      %c0_17 = arith.constant 0 : index
      %c0_18 = arith.constant 0 : index
      %23 = vector.load %arg6[%c0_17, %c0_18] : memref<128x128xf32, #tpu.memory_space<vmem>>, vector<128x128xf32>
      tpu.vector_store %arg6[%c0_17, %c0_18], %22 {strides = array<i32>} : memref<128x128xf32, #tpu.memory_space<vmem>>, vector<128x128xf32>,
    } else {
    }
    return
  }
  func.func @transform_0(%arg0: i32, %arg1: i32) -> (i32, i32) {
    %c0_i32 = arith.constant 0 : i32
    return %arg0, %arg1 : i32, i32
  }
  func.func @transform_1(%arg0: i32, %arg1: i32) -> (i32, i32) {
    %c0_i32 = arith.constant 0 : i32
    %c0_i32_0 = arith.constant 0 : i32
    %c0_i32_1 = arith.constant 0 : i32
    return %c0_i32, %c0_i32_0 : i32, i32
  }
  func.func @transform_2(%arg0: i32, %arg1: i32) -> (i32, i32) {
    %c0_i32 = arith.constant 0 : i32
    %c0_i32_0 = arith.constant 0 : i32
    %c0_i32_1 = arith.constant 0 : i32
    return %c0_i32, %c0_i32_0 : i32, i32
  }
  func.func @transform_3(%arg0: i32, %arg1: i32) -> (i32, i32) {
    %c0_i32 = arith.constant 0 : i32
    %c0_i32_0 = arith.constant 0 : i32
    %c0_i32_1 = arith.constant 0 : i32
    return %c0_i32, %c0_i32_0 : i32, i32
  }
  func.func @transform_4(%arg0: i32, %arg1: i32) -> (i32, i32) {
    %c0_i32 = arith.constant 0 : i32
    %c0_i32_0 = arith.constant 0 : i32
    return %arg0, %c0_i32 : i32, i32
  }
}

</mosaic_0001>

<llo_original>
// kernel: gcn_forward.1
$region0: #{gcn_forward.1}
  #allocation0 [shape = 'u32[]', space=smem, size = 0x4, offset = 0x4, fixed_abs, tag = 'smem constant byte address 0x4 - core index']
  #allocation1 [shape = 'u32[72,128]{1,0:T(1,128)}', space=vmem, size = 0x9000, scoped, tag = 'internal scratch']
  #allocation2 [shape = 'f32[128,128]{1,0:T(8,128)}', space=vmem, size = 0x10000, scoped, tag = 'scratch operand']
  %s0 = inlined_call_operand.vmem [shape: bf16[256,256], index: 0, kind: input, shape index: {}]
  %s1 = inlined_call_operand.vmem [shape: bf16[256,128], index: 1, kind: input, shape index: {}]
  %s2 = inlined_call_operand.vmem [shape: f32[128,128], index: 2, kind: input, shape index: {}]
  %s3 = inlined_call_operand.vmem [shape: f32[1,128], index: 3, kind: input, shape index: {}]
  %s4 = inlined_call_operand.hbm [shape: f32[256,128], index: 4, kind: output, shape index: {}]
  %s5 = sld [smem:[#allocation0]]
  $region57: #{gcn_forward.1} parent=0
    _
  %s7 = ssub.s32 1, %s5
  %s8 = scalar_select 0, %s7, %s5
  $region1: #{gcn_forward.1} parent=0
    #allocation3 [shape = 'u8[131072]{0}', space=vmem, size = 0x20000, scoped, tag = 'output window, operand 0']
    #allocation4 [shape = 's32[2]{0}', space=sflag, size = 0x8, scoped, tag = 'scoped memory for gcn_forward.1']
    %9 = vsyncpa [#allocation4], 0
    %s10 = scalar_lea.sflag [#allocation4], 1
    %11 = vsyncpa %s10, 0
    loop: start=0, step=1, limit=4
    $region2: #{gcn_forward.1} parent=1 // loop_pre_header
      _
    $region3: #{gcn_forward.1} parent=1 // loop_header
      %s13 = sphi 0, %s17
      %p14 = scmp.ge.s32.totalorder %s13, 4
      %s20 = sphi 0, %s32
      %s21 = sphi 0, %s28
      %s22 = sphi 0, %s20
      %s23 = sphi 0, %s21
      %s24 = sphi 0, %s22
      %s25 = sphi 0, %s23
      %s37 = sphi 0, %s39
      %s40 = sphi 0, %s37
      %s41 = sphi 0, %s40
      %s57 = sphi 0, %s41
      %s61 = sphi 0, %s61
      %s63 = sphi 0, %s61
      %s64 = sphi 0, %s63
      %s78 = sphi 0, %s64
      %s82 = sphi 0, %s82
      %s84 = sphi 0, %s82
      %s85 = sphi 0, %s84
      %s99 = sphi 0, %s85
      %s103 = sphi 0, %s103
      %s105 = sphi 0, %s103
      %s106 = sphi 0, %s105
      %s120 = sphi 0, %s106
      %s126 = sphi 0, %s128
      %s129 = sphi 0, %s126
      %s130 = sphi 0, %s129
      %s146 = sphi 0, %s130
    $region4: #{gcn_forward.1} parent=1 // loop_header_branch
      %16 = sbr.rel (%p14) target = $region8
    $region5: #{gcn_forward.1} parent=1 // loop_body
      %s18 = ssub.s32 %s13, 1
      %s19 = ssub.s32 %s13, 2
      %s26 = sadd.s32 1, %s21
      %p27 = scmp.ge.s32.totalorder %s26, 1
      %s28 = scalar_select %p27, 0, %s26
      %s29 = sadd.s32 1, %s20
      %s30 = scalar_select %p27, %s29, %s20
      %p31 = scmp.ge.s32.totalorder %s30, 2
      %s32 = scalar_select %p31, 0, %s30
      %s33 = ssub.s32 %s20, %s32
      %s34 = ssub.s32 %s21, %s28
      %s35 = sor.u32 %s33, %s34
      %p36 = scmp.eq.s32.totalorder %s35, 0
      %s38 = sadd.s32 %s37, 1
      %s39 = scalar_select %p36, %s37, %s38
      %p42 = pneg %p36
      %p43 = scmp.eq.s32.totalorder %s13, 1
      %p44 = por %p42, %p43
      %p45 = scmp.ne.s32.totalorder %s37, %s40
      %p46 = scmp.eq.s32.totalorder %s13, 0
      %p47 = por %p45, %p46
      %p48 = scmp.ne.s32.totalorder %s37, %s40
      %p49 = scmp.eq.s32.totalorder %s18, 1
      %p50 = por %p48, %p49
      %p51 = scmp.ne.s32.totalorder %s40, %s41
      %p52 = scmp.eq.s32.totalorder %s18, 0
      %p53 = por %p51, %p52
      %p54 = scmp.ne.s32.totalorder %s40, %s41
      %p55 = scmp.eq.s32.totalorder %s19, 1
      %p56 = por %p54, %p55
      %p58 = scmp.ne.s32.totalorder %s41, %s57
      %p59 = scmp.eq.s32.totalorder %s19, 0
      %p60 = por %p58, %p59
      %s62 = sadd.s32 %s61, 1
      %p65 = scmp.eq.s32.totalorder %s13, 1
      %p66 = scmp.ne.s32.totalorder %s61, %s63
      %p67 = scmp.eq.s32.totalorder %s13, 0
      %p68 = por %p66, %p67
      %p69 = scmp.ne.s32.totalorder %s61, %s63
      %p70 = scmp.eq.s32.totalorder %s18, 1
      %p71 = por %p69, %p70
      %p72 = scmp.ne.s32.totalorder %s63, %s64
      %p73 = scmp.eq.s32.totalorder %s18, 0
      %p74 = por %p72, %p73
      %p75 = scmp.ne.s32.totalorder %s63, %s64
      %p76 = scmp.eq.s32.totalorder %s19, 1
      %p77 = por %p75, %p76
      %p79 = scmp.ne.s32.totalorder %s64, %s78
      %p80 = scmp.eq.s32.totalorder %s19, 0
      %p81 = por %p79, %p80
      %s83 = sadd.s32 %s82, 1
      %p86 = scmp.eq.s32.totalorder %s13, 1
      %p87 = scmp.ne.s32.totalorder %s82, %s84
      %p88 = scmp.eq.s32.totalorder %s13, 0
      %p89 = por %p87, %p88
      %p90 = scmp.ne.s32.totalorder %s82, %s84
      %p91 = scmp.eq.s32.totalorder %s18, 1
      %p92 = por %p90, %p91
      %p93 = scmp.ne.s32.totalorder %s84, %s85
      %p94 = scmp.eq.s32.totalorder %s18, 0
      %p95 = por %p93, %p94
      %p96 = scmp.ne.s32.totalorder %s84, %s85
      %p97 = scmp.eq.s32.totalorder %s19, 1
      %p98 = por %p96, %p97
      %p100 = scmp.ne.s32.totalorder %s85, %s99
      %p101 = scmp.eq.s32.totalorder %s19, 0
      %p102 = por %p100, %p101
      %s104 = sadd.s32 %s103, 1
      %p107 = scmp.eq.s32.totalorder %s13, 1
      %p108 = scmp.ne.s32.totalorder %s103, %s105
      %p109 = scmp.eq.s32.totalorder %s13, 0
      %p110 = por %p108, %p109
      %p111 = scmp.ne.s32.totalorder %s103, %s105
      %p112 = scmp.eq.s32.totalorder %s18, 1
      %p113 = por %p111, %p112
      %p114 = scmp.ne.s32.totalorder %s105, %s106
      %p115 = scmp.eq.s32.totalorder %s18, 0
      %p116 = por %p114, %p115
      %p117 = scmp.ne.s32.totalorder %s105, %s106
      %p118 = scmp.eq.s32.totalorder %s19, 1
      %p119 = por %p117, %p118
      %p121 = scmp.ne.s32.totalorder %s106, %s120
      %p122 = scmp.eq.s32.totalorder %s19, 0
      %p123 = por %p121, %p122
      %s124 = ssub.s32 %s20, %s32
      %p125 = scmp.eq.s32.totalorder %s124, 0
      %s127 = sadd.s32 %s126, 1
      %s128 = scalar_select %p125, %s126, %s127
      %p131 = pneg %p125
      %p132 = scmp.eq.s32.totalorder %s13, 1
      %p133 = por %p131, %p132
      %p134 = scmp.ne.s32.totalorder %s126, %s129
      %p135 = scmp.eq.s32.totalorder %s13, 0
      %p136 = por %p134, %p135
      %p137 = scmp.ne.s32.totalorder %s126, %s129
      %p138 = scmp.eq.s32.totalorder %s18, 1
      %p139 = por %p137, %p138
      %p140 = scmp.ne.s32.totalorder %s129, %s130
      %p141 = scmp.eq.s32.totalorder %s18, 0
      %p142 = por %p140, %p141
      %p143 = scmp.ne.s32.totalorder %s129, %s130
      %p144 = scmp.eq.s32.totalorder %s19, 1
      %p145 = por %p143, %p144
      %p147 = scmp.ne.s32.totalorder %s130, %s146
      %p148 = scmp.eq.s32.totalorder %s19, 0
      %p149 = por %p147, %p148
      %p150 = scmp.le.s32.totalorder 1, %s13
      %p151 = scmp.lt.s32.totalorder %s13, 3
      %p152 = pnand %p150, %p151
      %p153 = pneg %p152
      // Predicated region
      $region9: #{gcn_forward.1} parent=5 // pred_check
        _
      $region10: #{gcn_forward.1} parent=5 // pred_check_branch
        %155 = sbr.rel (%p152) target = $region12
      $region11: #{gcn_forward.1} parent=5 // pred_region
        %s156 = ssub.s32 %s13, 1
        // Predicated region
        $region13: #{gcn_forward.1} parent=11 // pred_check
          %p157 = pneg %p74
        $region14: #{gcn_forward.1} parent=11 // pred_check_branch
          %159 = sbr.rel (%p157) target = $region16
        $region15: #{gcn_forward.1} parent=11 // pred_region
          _
        $region16: #{gcn_forward.1} parent=11 // pred_fallthru
          _
        // Predicated region
        $region17: #{gcn_forward.1} parent=11 // pred_check
          %p160 = pneg %p95
        $region18: #{gcn_forward.1} parent=11 // pred_check_branch
          %162 = sbr.rel (%p160) target = $region20
        $region19: #{gcn_forward.1} parent=11 // pred_region
          _
        $region20: #{gcn_forward.1} parent=11 // pred_fallthru
          _
        // Predicated region
        $region21: #{gcn_forward.1} parent=11 // pred_check
          %p163 = pneg %p116
        $region22: #{gcn_forward.1} parent=11 // pred_check_branch
          %165 = sbr.rel (%p163) target = $region24
        $region23: #{gcn_forward.1} parent=11 // pred_region
          _
        $region24: #{gcn_forward.1} parent=11 // pred_fallthru
          _
      $region12: #{gcn_forward.1} parent=5 // pred_fallthru
        _
      %p166 = scmp.lt.s32.totalorder %s13, 2
      // Predicated region
      $region25: #{gcn_forward.1} parent=5 // pred_check
        %p167 = pneg %p166
      $region26: #{gcn_forward.1} parent=5 // pred_check_branch
        %169 = sbr.rel (%p167) target = $region28
      $region27: #{gcn_forward.1} parent=5 // pred_region
        // Predicated region
        $region29: #{gcn_forward.1} parent=27 // pred_check
          %p170 = pneg %p47
        $region30: #{gcn_forward.1} parent=27 // pred_check_branch
          %172 = sbr.rel (%p170) target = $region32
        $region31: #{gcn_forward.1} parent=27 // pred_region
          %s173 = smul.u32 16, %s20
          %s174 = smul.u32 2, %s21
          %p175 = scmp.lt.s32.totalorder %s173, 31
          %s176 = scalar_select %p175, %s173, 31
          %p177 = scmp.lt.s32.totalorder %s174, 1
          %s178 = scalar_select %p177, %s174, 1
          %s179 = smul.addr %s176, 2
          %s180 = sadd.s32 %s178, %s179
          %s181 = smul.addr %s180, 4
          %s182 = scalar_lea.vmem %s0, %s181
          %s183 = smul.u32 16, %s20
          %s184 = smul.u32 2, %s21
        $region32: #{gcn_forward.1} parent=27 // pred_fallthru
          _
      $region28: #{gcn_forward.1} parent=5 // pred_fallthru
        _
      %p185 = scmp.le.s32.totalorder 1, %s13
      %p186 = scmp.lt.s32.totalorder %s13, 3
      %p187 = pnand %p185, %p186
      %p188 = pneg %p187
      // Predicated region
      $region33: #{gcn_forward.1} parent=5 // pred_check
        _
      $region34: #{gcn_forward.1} parent=5 // pred_check_branch
        %190 = sbr.rel (%p187) target = $region36
      $region35: #{gcn_forward.1} parent=5 // pred_region
        %s191 = ssub.s32 %s13, 1
        %s192 = smul.u32 16, %s22
        %s193 = smul.u32 2, %s23
        %p194 = scmp.lt.s32.totalorder %s192, 31
        %s195 = scalar_select %p194, %s192, 31
        %p196 = scmp.lt.s32.totalorder %s193, 1
        %s197 = scalar_select %p196, %s193, 1
        %s198 = smul.addr %s195, 2
        %s199 = sadd.s32 %s197, %s198
        %s200 = smul.addr %s199, 4
        %s201 = scalar_lea.vmem %s0, %s200
        %p202 = pneg %p53
        %p203 = pneg %p50
        %p204 = pneg %p74
        %p205 = pneg %p71
        %p206 = pneg %p95
        %p207 = pneg %p92
        %p208 = pneg %p116
        %p209 = pneg %p113
        %p210 = pneg %p142
        %p211 = pneg %p139
        %s212 = sand.u32 %s129, 1
        %s213 = scalar_lea.sflag [#allocation4], %s212
        %s214 = sand.u32 %s129, 1
        %s215 = smul.addr %s214, 128
        %s216 = scalar_lea.vmem [#allocation3], %s215
        %s217 = smul.u32 16, %s22
        %s218 = smul.u32 2, %s23
        %p219 = scmp.lt.s32.totalorder %s217, 31
        %s220 = scalar_select %p219, %s217, 31
        %p221 = scmp.lt.s32.totalorder %s218, 1
        %s222 = scalar_select %p221, %s218, 1
        %s223 = smul.addr %s220, 2
        %s224 = sadd.s32 %s222, %s223
        %s225 = smul.addr %s224, 4
        %s226 = scalar_lea.vmem %s0, %s225
        %s227 = smul.u32 16, %s22
        %s228 = smul.u32 2, %s23
        %s229 = smul.u32 16, %s22
        %p230 = scmp.eq.s32.totalorder %s23, 0
        // Predicated region
        $region37: #{gcn_forward.1} parent=35 // pred_check
          %p231 = pneg %p230
        $region38: #{gcn_forward.1} parent=35 // pred_check_branch
          %233 = sbr.rel (%p231) target = $region40
        $region39: #{gcn_forward.1} parent=35 // pred_region
          %234 = vst [vmem:[#allocation2] sm:$0xff] 0.0
          %235 = vst [vmem:[#allocation2 + $0x8] sm:$0xff] 0.0
          %236 = vst [vmem:[#allocation2 + $0x10] sm:$0xff] 0.0
          %237 = vst [vmem:[#allocation2 + $0x18] sm:$0xff] 0.0
          %238 = vst [vmem:[#allocation2 + $0x20] sm:$0xff] 0.0
          %239 = vst [vmem:[#allocation2 + $0x28] sm:$0xff] 0.0
          %240 = vst [vmem:[#allocation2 + $0x30] sm:$0xff] 0.0
          %241 = vst [vmem:[#allocation2 + $0x38] sm:$0xff] 0.0
          %242 = vst [vmem:[#allocation2 + $0x40] sm:$0xff] 0.0
          %243 = vst [vmem:[#allocation2 + $0x48] sm:$0xff] 0.0
          %244 = vst [vmem:[#allocation2 + $0x50] sm:$0xff] 0.0
          %245 = vst [vmem:[#allocation2 + $0x58] sm:$0xff] 0.0
          %246 = vst [vmem:[#allocation2 + $0x60] sm:$0xff] 0.0
          %247 = vst [vmem:[#allocation2 + $0x68] sm:$0xff] 0.0
          %248 = vst [vmem:[#allocation2 + $0x70] sm:$0xff] 0.0
          %249 = vst [vmem:[#allocation2 + $0x78] sm:$0xff] 0.0
        $region40: #{gcn_forward.1} parent=35 // pred_fallthru
          _
        %s250 = smul.u32 %s23, 256
        %s251 = sshra.s32 %s250, 3
        %s252 = sand.u32 %s250, 7
        %s253 = smul.addr %s251, 4
        %s254 = scalar_lea.vmem %s1, %s253
        %v255 = vld [vmem:[%s254] sm:$0xf]
        %v256 = vld [vmem:[%s254 + $0x4] sm:$0xf]
        %v257 = vld [vmem:[%s254 + $0x8] sm:$0xf]
        %v258 = vld [vmem:[%s254 + $0xc] sm:$0xf]
        %v259 = vld [vmem:[%s254 + $0x10] sm:$0xf]
        %v260 = vld [vmem:[%s254 + $0x14] sm:$0xf]
        %v261 = vld [vmem:[%s254 + $0x18] sm:$0xf]
        %v262 = vld [vmem:[%s254 + $0x1c] sm:$0xf]
        %v263 = vld [vmem:[%s254 + $0x20] sm:$0xf]
        %v264 = vld [vmem:[%s254 + $0x24] sm:$0xf]
        %v265 = vld [vmem:[%s254 + $0x28] sm:$0xf]
        %v266 = vld [vmem:[%s254 + $0x2c] sm:$0xf]
        %v267 = vld [vmem:[%s254 + $0x30] sm:$0xf]
        %v268 = vld [vmem:[%s254 + $0x34] sm:$0xf]
        %v269 = vld [vmem:[%s254 + $0x38] sm:$0xf]
        %v270 = vld [vmem:[%s254 + $0x3c] sm:$0xf]
        %v271 = vld [vmem:[%s254 + $0x40] sm:$0xf]
        %v272 = vld [vmem:[%s254 + $0x44] sm:$0xf]
        %v273 = vld [vmem:[%s254 + $0x48] sm:$0xf]
        %v274 = vld [vmem:[%s254 + $0x4c] sm:$0xf]
        %v275 = vld [vmem:[%s254 + $0x50] sm:$0xf]
        %v276 = vld [vmem:[%s254 + $0x54] sm:$0xf]
        %v277 = vld [vmem:[%s254 + $0x58] sm:$0xf]
        %v278 = vld [vmem:[%s254 + $0x5c] sm:$0xf]
        %v279 = vld [vmem:[%s254 + $0x60] sm:$0xf]
        %v280 = vld [vmem:[%s254 + $0x64] sm:$0xf]
        %v281 = vld [vmem:[%s254 + $0x68] sm:$0xf]
        %v282 = vld [vmem:[%s254 + $0x6c] sm:$0xf]
        %v283 = vld [vmem:[%s254 + $0x70] sm:$0xf]
        %v284 = vld [vmem:[%s254 + $0x74] sm:$0xf]
        %v285 = vld [vmem:[%s254 + $0x78] sm:$0xf]
        %v286 = vld [vmem:[%s254 + $0x7c] sm:$0xf]
        %v287 = vld [vmem:[#allocation2] sm:$0xff]
        %v288 = vld [vmem:[#allocation2 + $0x8] sm:$0xff]
        %v289 = vld [vmem:[#allocation2 + $0x10] sm:$0xff]
        %v290 = vld [vmem:[#allocation2 + $0x18] sm:$0xff]
        %v291 = vld [vmem:[#allocation2 + $0x20] sm:$0xff]
        %v292 = vld [vmem:[#allocation2 + $0x28] sm:$0xff]
        %v293 = vld [vmem:[#allocation2 + $0x30] sm:$0xff]
        %v294 = vld [vmem:[#allocation2 + $0x38] sm:$0xff]
        %v295 = vld [vmem:[#allocation2 + $0x40] sm:$0xff]
        %v296 = vld [vmem:[#allocation2 + $0x48] sm:$0xff]
        %v297 = vld [vmem:[#allocation2 + $0x50] sm:$0xff]
        %v298 = vld [vmem:[#allocation2 + $0x58] sm:$0xff]
        %v299 = vld [vmem:[#allocation2 + $0x60] sm:$0xff]
        %v300 = vld [vmem:[#allocation2 + $0x68] sm:$0xff]
        %v301 = vld [vmem:[#allocation2 + $0x70] sm:$0xff]
        %v302 = vld [vmem:[#allocation2 + $0x78] sm:$0xff]
        %v303 = vld [vmem:[%s226] sm:$0xff]
        %v304 = vld [vmem:[%s226 + $0x8] sm:$0xff]
        %v305 = vld [vmem:[%s226 + $0x10] sm:$0xff]
        %v306 = vld [vmem:[%s226 + $0x18] sm:$0xff]
        %v307 = vld [vmem:[%s226 + $0x20] sm:$0xff]
        %v308 = vld [vmem:[%s226 + $0x28] sm:$0xff]
        %v309 = vld [vmem:[%s226 + $0x30] sm:$0xff]
        %v310 = vld [vmem:[%s226 + $0x38] sm:$0xff]
        %v311 = vld [vmem:[%s226 + $0x40] sm:$0xff]
        %v312 = vld [vmem:[%s226 + $0x48] sm:$0xff]
        %v313 = vld [vmem:[%s226 + $0x50] sm:$0xff]
        %v314 = vld [vmem:[%s226 + $0x58] sm:$0xff]
        %v315 = vld [vmem:[%s226 + $0x60] sm:$0xff]
        %v316 = vld [vmem:[%s226 + $0x68] sm:$0xff]
        %v317 = vld [vmem:[%s226 + $0x70] sm:$0xff]
        %v318 = vld [vmem:[%s226 + $0x78] sm:$0xff]
        %v335 = vunpack.c.l.b16 %v303
        %v336 = vunpack.c.h.b16 %v303
        %v337 = vunpack.c.l.b16 %v304
        %v338 = vunpack.c.h.b16 %v304
        %v339 = vunpack.c.l.b16 %v305
        %v340 = vunpack.c.h.b16 %v305
        %v341 = vunpack.c.l.b16 %v306
        %v342 = vunpack.c.h.b16 %v306
        %v343 = vunpack.c.l.b16 %v307
        %v344 = vunpack.c.h.b16 %v307
        %v345 = vunpack.c.l.b16 %v308
        %v346 = vunpack.c.h.b16 %v308
        %v347 = vunpack.c.l.b16 %v309
        %v348 = vunpack.c.h.b16 %v309
        %v349 = vunpack.c.l.b16 %v310
        %v350 = vunpack.c.h.b16 %v310
        %v351 = vunpack.c.l.b16 %v311
        %v352 = vunpack.c.h.b16 %v311
        %v353 = vunpack.c.l.b16 %v312
        %v354 = vunpack.c.h.b16 %v312
        %v355 = vunpack.c.l.b16 %v313
        %v356 = vunpack.c.h.b16 %v313
        %v357 = vunpack.c.l.b16 %v314
        %v358 = vunpack.c.h.b16 %v314
        %v359 = vunpack.c.l.b16 %v315
        %v360 = vunpack.c.h.b16 %v315
        %v361 = vunpack.c.l.b16 %v316
        %v362 = vunpack.c.h.b16 %v316
        %v363 = vunpack.c.l.b16 %v317
        %v364 = vunpack.c.h.b16 %v317
        %v365 = vunpack.c.l.b16 %v318
        %v366 = vunpack.c.h.b16 %v318
        %v367 = vpack.c.b16 %v337, %v335
        %v368 = vpack.c.b16 %v338, %v336
        %v369 = vpack.c.b16 %v341, %v339
        %v370 = vpack.c.b16 %v342, %v340
        %v371 = vpack.c.b16 %v345, %v343
        %v372 = vpack.c.b16 %v346, %v344
        %v373 = vpack.c.b16 %v349, %v347
        %v374 = vpack.c.b16 %v350, %v348
        %v375 = vpack.c.b16 %v353, %v351
        %v376 = vpack.c.b16 %v354, %v352
        %v377 = vpack.c.b16 %v357, %v355
        %v378 = vpack.c.b16 %v358, %v356
        %v379 = vpack.c.b16 %v361, %v359
        %v380 = vpack.c.b16 %v362, %v360
        %v381 = vpack.c.b16 %v365, %v363
        %v382 = vpack.c.b16 %v366, %v364
        %v431 = vunpack.c.l.b16 %v255
        %v432 = vunpack.c.l.b16 %v256
        %v433 = vunpack.c.l.b16 %v257
        %v434 = vunpack.c.l.b16 %v258
        %v435 = vunpack.c.l.b16 %v259
        %v436 = vunpack.c.l.b16 %v260
        %v437 = vunpack.c.l.b16 %v261
        %v438 = vunpack.c.l.b16 %v262
        %v439 = vunpack.c.l.b16 %v263
        %v440 = vunpack.c.l.b16 %v264
        %v441 = vunpack.c.l.b16 %v265
        %v442 = vunpack.c.l.b16 %v266
        %v443 = vunpack.c.l.b16 %v267
        %v444 = vunpack.c.l.b16 %v268
        %v445 = vunpack.c.l.b16 %v269
        %v446 = vunpack.c.l.b16 %v270
        %v447 = vunpack.c.l.b16 %v271
        %v448 = vunpack.c.l.b16 %v272
        %v449 = vunpack.c.l.b16 %v273
        %v450 = vunpack.c.l.b16 %v274
        %v451 = vunpack.c.l.b16 %v275
        %v452 = vunpack.c.l.b16 %v276
        %v453 = vunpack.c.l.b16 %v277
        %v454 = vunpack.c.l.b16 %v278
        %v455 = vunpack.c.l.b16 %v279
        %v456 = vunpack.c.l.b16 %v280
        %v457 = vunpack.c.l.b16 %v281
        %v458 = vunpack.c.l.b16 %v282
        %v459 = vunpack.c.l.b16 %v283
        %v460 = vunpack.c.l.b16 %v284
        %v461 = vunpack.c.l.b16 %v285
        %v462 = vunpack.c.l.b16 %v286
        %v463 = vpack.c.b16 %v432, %v431
        %v464 = vpack.c.b16 %v434, %v433
        %v465 = vpack.c.b16 %v436, %v435
        %v466 = vpack.c.b16 %v438, %v437
        %v467 = vpack.c.b16 %v440, %v439
        %v468 = vpack.c.b16 %v442, %v441
        %v469 = vpack.c.b16 %v444, %v443
        %v470 = vpack.c.b16 %v446, %v445
        %v471 = vpack.c.b16 %v448, %v447
        %v472 = vpack.c.b16 %v450, %v449
        %v473 = vpack.c.b16 %v452, %v451
        %v474 = vpack.c.b16 %v454, %v453
        %v475 = vpack.c.b16 %v456, %v455
        %v476 = vpack.c.b16 %v458, %v457
        %v477 = vpack.c.b16 %v460, %v459
        %v478 = vpack.c.b16 %v462, %v461
        %495 = vmatpush.bf16.msra.mxu0 %v470
        %496 = vmatpush.bf16.msra.mxu0 %v469
        %497 = vmatpush.bf16.msra.mxu0 %v468
        %498 = vmatpush.bf16.msra.mxu0 %v467
        %499 = vmatpush.bf16.msra.mxu0 %v466
        %500 = vmatpush.bf16.msra.mxu0 %v465
        %501 = vmatpush.bf16.msra.mxu0 %v464
        %502 = vmatpush.bf16.msra.mxu0 %v463
        %503 = vmatmul.bf16.gmra.mxu0 %v367
        %v504 = vpop.f32.mrf.mxu0
        %v505 = vadd.f32 0.0, %v504
        %v506 = vpop.f32.mrf.mxu0
        %v507 = vadd.f32 0.0, %v506
        %508 = vmatmul.bf16.gmra.mxu0 %v369
        %v509 = vpop.f32.mrf.mxu0
        %v510 = vadd.f32 0.0, %v509
        %v511 = vpop.f32.mrf.mxu0
        %v512 = vadd.f32 0.0, %v511
        %513 = vmatmul.bf16.gmra.mxu0 %v371
        %v514 = vpop.f32.mrf.mxu0
        %v515 = vadd.f32 0.0, %v514
        %v516 = vpop.f32.mrf.mxu0
        %v517 = vadd.f32 0.0, %v516
        %518 = vmatmul.bf16.gmra.mxu0 %v373
        %v519 = vpop.f32.mrf.mxu0
        %v520 = vadd.f32 0.0, %v519
        %v521 = vpop.f32.mrf.mxu0
        %v522 = vadd.f32 0.0, %v521
        %523 = vmatmul.bf16.gmra.mxu0 %v375
        %v524 = vpop.f32.mrf.mxu0
        %v525 = vadd.f32 0.0, %v524
        %v526 = vpop.f32.mrf.mxu0
        %v527 = vadd.f32 0.0, %v526
        %528 = vmatmul.bf16.gmra.mxu0 %v377
        %v529 = vpop.f32.mrf.mxu0
        %v530 = vadd.f32 0.0, %v529
        %v531 = vpop.f32.mrf.mxu0
        %v532 = vadd.f32 0.0, %v531
        %533 = vmatmul.bf16.gmra.mxu0 %v379
        %v534 = vpop.f32.mrf.mxu0
        %v535 = vadd.f32 0.0, %v534
        %v536 = vpop.f32.mrf.mxu0
        %v537 = vadd.f32 0.0, %v536
        %538 = vmatmul.bf16.gmra.mxu0 %v381
        %v539 = vpop.f32.mrf.mxu0
        %v540 = vadd.f32 0.0, %v539
        %v541 = vpop.f32.mrf.mxu0
        %v542 = vadd.f32 0.0, %v541
        %543 = vdwg.mxu0
        %544 = vmatpush.bf16.msra.mxu0 %v478
        %545 = vmatpush.bf16.msra.mxu0 %v477
        %546 = vmatpush.bf16.msra.mxu0 %v476
        %547 = vmatpush.bf16.msra.mxu0 %v475
        %548 = vmatpush.bf16.msra.mxu0 %v474
        %549 = vmatpush.bf16.msra.mxu0 %v473
        %550 = vmatpush.bf16.msra.mxu0 %v472
        %551 = vmatpush.bf16.msra.mxu0 %v471
        %552 = vmatmul.bf16.gmra.mxu0 %v368
        %v553 = vpop.f32.mrf.mxu0
        %v554 = vadd.f32 %v505, %v553
        %v555 = vpop.f32.mrf.mxu0
        %v556 = vadd.f32 %v507, %v555
        %557 = vmatmul.bf16.gmra.mxu0 %v370
        %v558 = vpop.f32.mrf.mxu0
        %v559 = vadd.f32 %v510, %v558
        %v560 = vpop.f32.mrf.mxu0
        %v561 = vadd.f32 %v512, %v560
        %562 = vmatmul.bf16.gmra.mxu0 %v372
        %v563 = vpop.f32.mrf.mxu0
        %v564 = vadd.f32 %v515, %v563
        %v565 = vpop.f32.mrf.mxu0
        %v566 = vadd.f32 %v517, %v565
        %567 = vmatmul.bf16.gmra.mxu0 %v374
        %v568 = vpop.f32.mrf.mxu0
        %v569 = vadd.f32 %v520, %v568
        %v570 = vpop.f32.mrf.mxu0
        %v571 = vadd.f32 %v522, %v570
        %572 = vmatmul.bf16.gmra.mxu0 %v376
        %v573 = vpop.f32.mrf.mxu0
        %v574 = vadd.f32 %v525, %v573
        %v575 = vpop.f32.mrf.mxu0
        %v576 = vadd.f32 %v527, %v575
        %577 = vmatmul.bf16.gmra.mxu0 %v378
        %v578 = vpop.f32.mrf.mxu0
        %v579 = vadd.f32 %v530, %v578
        %v580 = vpop.f32.mrf.mxu0
        %v581 = vadd.f32 %v532, %v580
        %582 = vmatmul.bf16.gmra.mxu0 %v380
        %v583 = vpop.f32.mrf.mxu0
        %v584 = vadd.f32 %v535, %v583
        %v585 = vpop.f32.mrf.mxu0
        %v586 = vadd.f32 %v537, %v585
        %587 = vmatmul.bf16.gmra.mxu0 %v382
        %v588 = vpop.f32.mrf.mxu0
        %v589 = vadd.f32 %v540, %v588
        %v590 = vpop.f32.mrf.mxu0
        %v591 = vadd.f32 %v542, %v590
        %592 = vdwg.mxu0
        %v593 = vadd.f32 %v287, %v554
        %v594 = vadd.f32 %v288, %v556
        %v595 = vadd.f32 %v289, %v559
        %v596 = vadd.f32 %v290, %v561
        %v597 = vadd.f32 %v291, %v564
        %v598 = vadd.f32 %v292, %v566
        %v599 = vadd.f32 %v293, %v569
        %v600 = vadd.f32 %v294, %v571
        %v601 = vadd.f32 %v295, %v574
        %v602 = vadd.f32 %v296, %v576
        %v603 = vadd.f32 %v297, %v579
        %v604 = vadd.f32 %v298, %v581
        %v605 = vadd.f32 %v299, %v584
        %v606 = vadd.f32 %v300, %v586
        %v607 = vadd.f32 %v301, %v589
        %v608 = vadd.f32 %v302, %v591
        %609 = vst [vmem:[#allocation2] sm:$0xff] %v593
        %610 = vst [vmem:[#allocation2 + $0x8] sm:$0xff] %v594
        %611 = vst [vmem:[#allocation2 + $0x10] sm:$0xff] %v595
        %612 = vst [vmem:[#allocation2 + $0x18] sm:$0xff] %v596
        %613 = vst [vmem:[#allocation2 + $0x20] sm:$0xff] %v597
        %614 = vst [vmem:[#allocation2 + $0x28] sm:$0xff] %v598
        %615 = vst [vmem:[#allocation2 + $0x30] sm:$0xff] %v599
        %616 = vst [vmem:[#allocation2 + $0x38] sm:$0xff] %v600
        %617 = vst [vmem:[#allocation2 + $0x40] sm:$0xff] %v601
        %618 = vst [vmem:[#allocation2 + $0x48] sm:$0xff] %v602
        %619 = vst [vmem:[#allocation2 + $0x50] sm:$0xff] %v603
        %620 = vst [vmem:[#allocation2 + $0x58] sm:$0xff] %v604
        %621 = vst [vmem:[#allocation2 + $0x60] sm:$0xff] %v605
        %622 = vst [vmem:[#allocation2 + $0x68] sm:$0xff] %v606
        %623 = vst [vmem:[#allocation2 + $0x70] sm:$0xff] %v607
        %624 = vst [vmem:[#allocation2 + $0x78] sm:$0xff] %v608
        // Predicated region
        $region41: #{gcn_forward.1} parent=35 // pred_check
          %p625 = pneg %p230
        $region42: #{gcn_forward.1} parent=35 // pred_check_branch
          %627 = sbr.rel (%p625) target = $region44
        $region43: #{gcn_forward.1} parent=35 // pred_region
          %v628 = vld [vmem:[#allocation2] sm:$0xff]
          %v629 = vld [vmem:[#allocation2 + $0x8] sm:$0xff]
          %v630 = vld [vmem:[#allocation2 + $0x10] sm:$0xff]
          %v631 = vld [vmem:[#allocation2 + $0x18] sm:$0xff]
          %v632 = vld [vmem:[#allocation2 + $0x20] sm:$0xff]
          %v633 = vld [vmem:[#allocation2 + $0x28] sm:$0xff]
          %v634 = vld [vmem:[#allocation2 + $0x30] sm:$0xff]
          %v635 = vld [vmem:[#allocation2 + $0x38] sm:$0xff]
          %v636 = vld [vmem:[#allocation2 + $0x40] sm:$0xff]
          %v637 = vld [vmem:[#allocation2 + $0x48] sm:$0xff]
          %v638 = vld [vmem:[#allocation2 + $0x50] sm:$0xff]
          %v639 = vld [vmem:[#allocation2 + $0x58] sm:$0xff]
          %v640 = vld [vmem:[#allocation2 + $0x60] sm:$0xff]
          %v641 = vld [vmem:[#allocation2 + $0x68] sm:$0xff]
          %v642 = vld [vmem:[#allocation2 + $0x70] sm:$0xff]
          %v643 = vld [vmem:[#allocation2 + $0x78] sm:$0xff]
          %v644 = vld [vmem:[%s2] sm:$0xff]
          %v645 = vld [vmem:[%s2 + $0x8] sm:$0xff]
          %v646 = vld [vmem:[%s2 + $0x10] sm:$0xff]
          %v647 = vld [vmem:[%s2 + $0x18] sm:$0xff]
          %v648 = vld [vmem:[%s2 + $0x20] sm:$0xff]
          %v649 = vld [vmem:[%s2 + $0x28] sm:$0xff]
          %v650 = vld [vmem:[%s2 + $0x30] sm:$0xff]
          %v651 = vld [vmem:[%s2 + $0x38] sm:$0xff]
          %v652 = vld [vmem:[%s2 + $0x40] sm:$0xff]
          %v653 = vld [vmem:[%s2 + $0x48] sm:$0xff]
          %v654 = vld [vmem:[%s2 + $0x50] sm:$0xff]
          %v655 = vld [vmem:[%s2 + $0x58] sm:$0xff]
          %v656 = vld [vmem:[%s2 + $0x60] sm:$0xff]
          %v657 = vld [vmem:[%s2 + $0x68] sm:$0xff]
          %v658 = vld [vmem:[%s2 + $0x70] sm:$0xff]
          %v659 = vld [vmem:[%s2 + $0x78] sm:$0xff]
          %v660 = vld [vmem:[%s3] sm:$0x1]
          %v662 = vperm.slane %v660, 0
          %664 = vmatpush.msra.mxu0 %v659
          %665 = vmatpush.msra.mxu0 %v658
          %666 = vmatpush.msra.mxu0 %v657
          %667 = vmatpush.msra.mxu0 %v656
          %668 = vmatpush.msra.mxu0 %v655
          %669 = vmatpush.msra.mxu0 %v654
          %670 = vmatpush.msra.mxu0 %v653
          %671 = vmatpush.msra.mxu0 %v652
          %672 = vmatpush.msra.mxu0 %v651
          %673 = vmatpush.msra.mxu0 %v650
          %674 = vmatpush.msra.mxu0 %v649
          %675 = vmatpush.msra.mxu0 %v648
          %676 = vmatpush.msra.mxu0 %v647
          %677 = vmatpush.msra.mxu0 %v646
          %678 = vmatpush.msra.mxu0 %v645
          %679 = vmatpush.msra.mxu0 %v644
          %680 = vmatmul.f32.gmra.mxu0 %v628
          %v681 = vpop.f32.mrf.mxu0
          %v682 = vadd.f32 %v662, %v681
          %683 = vmatmul.f32.gmra.mxu0 %v629
          %v684 = vpop.f32.mrf.mxu0
          %v685 = vadd.f32 %v662, %v684
          %686 = vmatmul.f32.gmra.mxu0 %v630
          %v687 = vpop.f32.mrf.mxu0
          %v688 = vadd.f32 %v662, %v687
          %689 = vmatmul.f32.gmra.mxu0 %v631
          %v690 = vpop.f32.mrf.mxu0
          %v691 = vadd.f32 %v662, %v690
          %692 = vmatmul.f32.gmra.mxu0 %v632
          %v693 = vpop.f32.mrf.mxu0
          %v694 = vadd.f32 %v662, %v693
          %695 = vmatmul.f32.gmra.mxu0 %v633
          %v696 = vpop.f32.mrf.mxu0
          %v697 = vadd.f32 %v662, %v696
          %698 = vmatmul.f32.gmra.mxu0 %v634
          %v699 = vpop.f32.mrf.mxu0
          %v700 = vadd.f32 %v662, %v699
          %701 = vmatmul.f32.gmra.mxu0 %v635
          %v702 = vpop.f32.mrf.mxu0
          %v703 = vadd.f32 %v662, %v702
          %704 = vmatmul.f32.gmra.mxu0 %v636
          %v705 = vpop.f32.mrf.mxu0
          %v706 = vadd.f32 %v662, %v705
          %707 = vmatmul.f32.gmra.mxu0 %v637
          %v708 = vpop.f32.mrf.mxu0
          %v709 = vadd.f32 %v662, %v708
          %710 = vmatmul.f32.gmra.mxu0 %v638
          %v711 = vpop.f32.mrf.mxu0
          %v712 = vadd.f32 %v662, %v711
          %713 = vmatmul.f32.gmra.mxu0 %v639
          %v714 = vpop.f32.mrf.mxu0
          %v715 = vadd.f32 %v662, %v714
          %716 = vmatmul.f32.gmra.mxu0 %v640
          %v717 = vpop.f32.mrf.mxu0
          %v718 = vadd.f32 %v662, %v717
          %719 = vmatmul.f32.gmra.mxu0 %v641
          %v720 = vpop.f32.mrf.mxu0
          %v721 = vadd.f32 %v662, %v720
          %722 = vmatmul.f32.gmra.mxu0 %v642
          %v723 = vpop.f32.mrf.mxu0
          %v724 = vadd.f32 %v662, %v723
          %725 = vmatmul.f32.gmra.mxu0 %v643
          %v726 = vpop.f32.mrf.mxu0
          %v727 = vadd.f32 %v662, %v726
          %728 = vdwg.mxu0
          %v729 = vmax.f32 %v682, 0.0
          %v730 = vmax.f32 %v685, 0.0
          %v731 = vmax.f32 %v688, 0.0
          %v732 = vmax.f32 %v691, 0.0
          %v733 = vmax.f32 %v694, 0.0
          %v734 = vmax.f32 %v697, 0.0
          %v735 = vmax.f32 %v700, 0.0
          %v736 = vmax.f32 %v703, 0.0
          %v737 = vmax.f32 %v706, 0.0
          %v738 = vmax.f32 %v709, 0.0
          %v739 = vmax.f32 %v712, 0.0
          %v740 = vmax.f32 %v715, 0.0
          %v741 = vmax.f32 %v718, 0.0
          %v742 = vmax.f32 %v721, 0.0
          %v743 = vmax.f32 %v724, 0.0
          %v744 = vmax.f32 %v727, 0.0
          %745 = vst [vmem:[%s216] sm:$0xff] %v729
          %746 = vst [vmem:[%s216 + $0x8] sm:$0xff] %v730
          %747 = vst [vmem:[%s216 + $0x10] sm:$0xff] %v731
          %748 = vst [vmem:[%s216 + $0x18] sm:$0xff] %v732
          %749 = vst [vmem:[%s216 + $0x20] sm:$0xff] %v733
          %750 = vst [vmem:[%s216 + $0x28] sm:$0xff] %v734
          %751 = vst [vmem:[%s216 + $0x30] sm:$0xff] %v735
          %752 = vst [vmem:[%s216 + $0x38] sm:$0xff] %v736
          %753 = vst [vmem:[%s216 + $0x40] sm:$0xff] %v737
          %754 = vst [vmem:[%s216 + $0x48] sm:$0xff] %v738
          %755 = vst [vmem:[%s216 + $0x50] sm:$0xff] %v739
          %756 = vst [vmem:[%s216 + $0x58] sm:$0xff] %v740
          %757 = vst [vmem:[%s216 + $0x60] sm:$0xff] %v741
          %758 = vst [vmem:[%s216 + $0x68] sm:$0xff] %v742
          %759 = vst [vmem:[%s216 + $0x70] sm:$0xff] %v743
          %760 = vst [vmem:[%s216 + $0x78] sm:$0xff] %v744
        $region44: #{gcn_forward.1} parent=35 // pred_fallthru
          _
        %s761 = sand.u32 %s129, 1
        %s762 = scalar_lea.sflag [#allocation4], %s761
        %s763 = sand.u32 %s129, 1
        %s764 = smul.addr %s763, 128
        %s765 = scalar_lea.vmem [#allocation3], %s764
        // Predicated region
        $region45: #{gcn_forward.1} parent=35 // pred_check
          %p766 = pneg %p139
        $region46: #{gcn_forward.1} parent=35 // pred_check_branch
          %768 = sbr.rel (%p766) target = $region48
        $region47: #{gcn_forward.1} parent=35 // pred_region
          %s769 = smul.u32 16, %s22
          %771 = vsyncadd %s762, 0
          %s772 = smul.addr %s769, 8
          %s773 = scalar_lea.hbm %s4, %s772
          %s774 = sshll.u32 %s765, 4
          %s775 = int_to_ptr.vmem [resolvable:$true] %s774
          %s776 = sshll.u32 %s773, 4
          %s777 = int_to_ptr.hbm [resolvable:$true] %s776
          %782 = dma.vmem_to_hbm [thread:$0]  %s775, 2048, %s777, %s762, 128, 128, 8
        $region48: #{gcn_forward.1} parent=35 // pred_fallthru
          _
      $region36: #{gcn_forward.1} parent=5 // pred_fallthru
        _
      %p783 = scmp.le.s32.totalorder 2, %s13
      // Predicated region
      $region49: #{gcn_forward.1} parent=5 // pred_check
        %p784 = pneg %p783
      $region50: #{gcn_forward.1} parent=5 // pred_check_branch
        %786 = sbr.rel (%p784) target = $region52
      $region51: #{gcn_forward.1} parent=5 // pred_region
        %s787 = ssub.s32 %s13, 2
        // Predicated region
        $region53: #{gcn_forward.1} parent=51 // pred_check
          %p788 = pneg %p145
        $region54: #{gcn_forward.1} parent=51 // pred_check_branch
          %790 = sbr.rel (%p788) target = $region56
        $region55: #{gcn_forward.1} parent=51 // pred_region
          %s791 = sand.u32 %s130, 1
          %s792 = scalar_lea.sflag [#allocation4], %s791
          %s793 = sand.u32 %s130, 1
          %s794 = smul.addr %s793, 128
          %s795 = scalar_lea.vmem [#allocation3], %s794
          %797 = dma.done %s792, 2048
        $region56: #{gcn_forward.1} parent=51 // pred_fallthru
          _
      $region52: #{gcn_forward.1} parent=5 // pred_fallthru
        _
    $region6: #{gcn_forward.1} parent=1 // loop_footer
      %s17 = sadd.s32 1, %s13
    $region7: #{gcn_forward.1} parent=1 // loop_footer_branch
      %12 = sbr.rel target = $region3
    $region8: #{gcn_forward.1} parent=1 // loop_exit
      _
    %798 = vsyncpa [#allocation4], 1
    %s799 = scalar_lea.sflag [#allocation4], 1
    %800 = vsyncpa %s799, 1

</llo_original>
